<compile_context>
chip_gen: v7x
topology: tpu7x:2x2x1
jax: 0.10.0
libtpu: 0.0.40
codegen_flags: <defaults>
</compile_context>

<pallas_src>
import numpy as np
import jax
import jax.numpy as jnp
from jax.experimental import pallas as pl
from jax.experimental.pallas import tpu as pltpu

EPS = 1e-5


def make_kernel(N, H, L):
    M = N * H

    def kernel(x_ref, w1_ref, g1_ref, be1_ref, w2_ref, g2_ref, be2_ref,
               tmean_ref, out_ref):
        # x_ref   : (M, L) f32  lane-dense input, M = N*H, L = W*C (no halo rows)
        # w{1,2}  : (3L, L) bf16 fused block-banded conv weights (dy-major along K)
        # g/be    : (1, L) f32   BN gamma / beta tiled along lanes
        # tmean   : (L, L) f32   channel-sum-and-retile matrix, pre-scaled 1/(N*H*W)
        # out_ref : (M, L) f32

        # halo-row masks (h == 0 / h == H-1) -- also kill cross-batch roll bleed.
        h_idx = jax.lax.broadcasted_iota(jnp.int32, (M, L), 0) % H
        top = h_idx == 0
        bot = h_idx == H - 1

        def taps(y):
            # (M, L) f32 -> (M, 3L) bf16 = [row-above | row | row-below], halo zeroed.
            # Sublane rolls land on the XLU slot; rows where the roll wrapped
            # (global edge or batch boundary) are exactly the masked halo rows.
            up = jnp.where(top, 0.0, pltpu.roll(y, shift=1, axis=0))
            dn = jnp.where(bot, 0.0, pltpu.roll(y, shift=M - 1, axis=0))
            return jnp.concatenate([up, y, dn], axis=-1).astype(jnp.bfloat16)

        def conv3(y, w_ref):
            # single fused K = 3*L MXU matmul, f32 accumulation.
            return jnp.dot(taps(y), w_ref[...],
                           preferred_element_type=jnp.float32)

        def bn(y, g, b):
            # training-mode BN, single pass (E[x], E[x^2]) while y is live.
            s = jnp.sum(y, axis=0, keepdims=True)        # (1, L)
            ss = jnp.sum(y * y, axis=0, keepdims=True)   # (1, L)
            # one stacked stats matmul instead of two M=1 matmuls (f32 on MXU).
            st = jnp.dot(jnp.concatenate([s, ss], axis=0), tmean_ref[...],
                         preferred_element_type=jnp.float32)      # (2, L)
            mean = st[0:1, :]
            inv = jax.lax.rsqrt(st[1:2, :] - mean * mean + EPS)
            return (y - mean) * (inv * g) + b

        # ---- conv1 -> bn1 -> relu ------------------------------------------
        y1 = jnp.maximum(bn(conv3(x_ref[...], w1_ref),
                            g1_ref[...], be1_ref[...]), 0.0)

        # ---- conv2 -> bn2 -> +residual -> relu ------------------------------
        y2 = bn(conv3(y1, w2_ref), g2_ref[...], be2_ref[...])
        # residual re-read at point of use (keeps x's live range short).
        out_ref[...] = jnp.maximum(y2 + x_ref[...], 0.0)

    return kernel


def _banded_weights(w_oihw, width):
    """OIHW (Cout, Cin, 3, 3) -> (3*W*Cin, W*Cout) fused block-banded weights.

    Fuses the dx shift, the channel mix and the width zero-padding; the three
    dy taps are stacked along K (dy-major) to match the lane-concatenated
    [row-above | row | row-below] activation view.
    """
    cout, cin, _, _ = w_oihw.shape
    w = jnp.transpose(w_oihw, (2, 3, 1, 0)).astype(jnp.float32)   # (dy, dx, Cin, Cout)
    p = np.zeros((3, width, width), np.float32)                   # p[dx, wi, wo]
    for dx in range(3):
        for wo in range(width):
            wi = wo + dx - 1
            if 0 <= wi < width:                                   # w-direction zero padding
                p[dx, wi, wo] = 1.0
    b = jnp.einsum('xio,yxcd->yicod', jnp.asarray(p), w)          # (dy, wi, ci, wo, co)
    return b.reshape(3 * width * cin, width * cout)


def basic_block(x_nchw, w1, g1, b1, w2, g2, b2):
    """x_nchw: (N, C, H, W); w1, w2: (C, C, 3, 3) OIHW (PyTorch convention)."""
    N, C, H, W = x_nchw.shape
    L = W * C
    M = N * H
    assert L == 128, "kernel assumes exactly one lane tile (W*C == 128)"

    # NCHW -> lane-dense (N*H, W*C); no explicit padding (halo handled in-kernel).
    x = jnp.transpose(x_nchw, (0, 2, 3, 1)).reshape(M, L).astype(jnp.float32)

    w1k = _banded_weights(w1, W).astype(jnp.bfloat16)   # (3L, L) bf16 MXU operand
    w2k = _banded_weights(w2, W).astype(jnp.bfloat16)
    g1l = jnp.tile(g1.astype(jnp.float32), W).reshape(1, L)
    be1l = jnp.tile(b1.astype(jnp.float32), W).reshape(1, L)
    g2l = jnp.tile(g2.astype(jnp.float32), W).reshape(1, L)
    be2l = jnp.tile(b2.astype(jnp.float32), W).reshape(1, L)

    # channel-sum matrix: (row_sums @ tmean)[w*C+c] = mean over (N,H,W) of channel c.
    # NOTE: bakes 1/(N*H*W) -> must be rebuilt if the batch/spatial shape changes.
    lane = np.arange(L)
    tmean = (lane[:, None] % C == lane[None, :] % C).astype(np.float32) / float(M * W)
    tmean = jnp.asarray(tmean)

    vmem = pl.BlockSpec(memory_space=pltpu.MemorySpace.VMEM)
    out = pl.pallas_call(
        make_kernel(N, H, L),
        out_shape=jax.ShapeDtypeStruct((M, L), jnp.float32),
        in_specs=[vmem] * 8,
        out_specs=vmem,
        compiler_params=pltpu.CompilerParams(vmem_limit_bytes=32 * 1024 * 1024),
    )(x, w1k, g1l, be1l, w2k, g2l, be2l, tmean)

    return jnp.transpose(out.reshape(N, H, W, C), (0, 3, 1, 2))    # back to NCHW


def basic_block_ref(x, w1, g1, b1, w2, g2, b2):
    """Pure-JAX reference reproducing the PyTorch forward (training-mode BN)."""
    def conv(x, w):
        return jax.lax.conv_general_dilated(
            x, w, window_strides=(1, 1), padding=((1, 1), (1, 1)),
            dimension_numbers=('NCHW', 'OIHW', 'NCHW'))

    def bn(y, g, b):
        m = jnp.mean(y, axis=(0, 2, 3), keepdims=True)
        v = jnp.mean((y - m) ** 2, axis=(0, 2, 3), keepdims=True)
        return (y - m) * jax.lax.rsqrt(v + EPS) * g.reshape(1, -1, 1, 1) \
            + b.reshape(1, -1, 1, 1)

    out = jax.nn.relu(bn(conv(x, w1), g1, b1))
    out = bn(conv(out, w2), g2, b2)
    return jax.nn.relu(out + x)


if __name__ == "__main__":
    N, C, H, W = 2, 8, 16, 16      # inplanes == planes, stride=1, downsample=None; W*C = 128
    key = jax.random.PRNGKey(0)
    kx, kw1, kw2, kg1, kb1, kg2, kb2 = jax.random.split(key, 7)

    x = jax.random.normal(kx, (N, C, H, W), jnp.float32)
    fan = 9 * C
    w1 = jax.random.normal(kw1, (C, C, 3, 3), jnp.float32) * (2.0 / fan) ** 0.5
    w2 = jax.random.normal(kw2, (C, C, 3, 3), jnp.float32) * (2.0 / fan) ** 0.5
    g1 = 1.0 + 0.1 * jax.random.normal(kg1, (C,), jnp.float32)
    b1 = 0.1 * jax.random.normal(kb1, (C,), jnp.float32)
    g2 = 1.0 + 0.1 * jax.random.normal(kg2, (C,), jnp.float32)
    b2 = 0.1 * jax.random.normal(kb2, (C,), jnp.float32)

    out = jax.block_until_ready(basic_block(x, w1, g1, b1, w2, g2, b2))
    ref = jax.block_until_ready(basic_block_ref(x, w1, g1, b1, w2, g2, b2))

    assert out.shape == (N, C, H, W)
    assert bool(jnp.all(jnp.isfinite(out)))
    err = jnp.abs(out - ref)
    # bf16 MXU operands -> slightly relaxed elementwise tolerance; the tight
    # mean-error bound still catches structural bugs (tap order, BN stats).
    assert float(jnp.mean(err)) < 1e-2, float(jnp.mean(err))
    assert bool(jnp.allclose(out, ref, atol=5e-2, rtol=5e-2)), float(jnp.max(err))

    print("KERNEL_OK")
</pallas_src>

<mosaic_0001>
module attributes {stable_mosaic.version = 11 : i64} {
  func.func @kernel(%arg0: memref<32x128xf32, #tpu.memory_space<vmem>>, %arg1: memref<384x128xbf16, #tpu.memory_space<vmem>>, %arg2: memref<1x128xf32, #tpu.memory_space<vmem>>, %arg3: memref<1x128xf32, #tpu.memory_space<vmem>>, %arg4: memref<384x128xbf16, #tpu.memory_space<vmem>>, %arg5: memref<1x128xf32, #tpu.memory_space<vmem>>, %arg6: memref<1x128xf32, #tpu.memory_space<vmem>>, %arg7: memref<128x128xf32, #tpu.memory_space<vmem>>, %arg8: memref<32x128xf32, #tpu.memory_space<vmem>>) attributes {dimension_semantics = [], scalar_prefetch = 0 : i64, scratch_operands = 0 : i64, tpu.core_type = #tpu.core_type<tc>} {
    %0 = tpu.iota {dimensions = array<i32: 0>} : vector<32x128xi32>
    %c16_i32 = arith.constant 16 : i32
    %c0_i32 = arith.constant 0 : i32
    %1 = arith.cmpi eq, %c16_i32, %c0_i32 : i32
    %c1_i32 = arith.constant 1 : i32
    %2 = arith.select %1, %c1_i32, %c16_i32 : i32
    %3 = vector.broadcast %2 : i32 to vector<32x128xi32>
    %4 = arith.remsi %0, %3 : vector<32x128xi32>
    %c0_i32_0 = arith.constant 0 : i32
    %5 = vector.broadcast %c0_i32_0 : i32 to vector<32x128xi32>
    %6 = arith.cmpi ne, %4, %5 : vector<32x128xi32>
    %c0_i32_1 = arith.constant 0 : i32
    %7 = vector.broadcast %c0_i32_1 : i32 to vector<32x128xi32>
    %8 = arith.cmpi slt, %4, %7 : vector<32x128xi32>
    %c0_i32_2 = arith.constant 0 : i32
    %9 = arith.cmpi slt, %2, %c0_i32_2 : i32
    %10 = vector.broadcast %9 : i1 to vector<32x128xi1>
    %11 = vector.broadcast %10 : vector<32x128xi1> to vector<32x128xi1>
    %12 = arith.xori %8, %11 : vector<32x128xi1>
    %13 = arith.andi %12, %6 : vector<32x128xi1>
    %14 = vector.broadcast %2 : i32 to vector<32x128xi32>
    %15 = arith.addi %4, %14 : vector<32x128xi32>
    %16 = arith.select %13, %15, %4 : vector<32x128xi1>, vector<32x128xi32>
    %c0_i32_3 = arith.constant 0 : i32
    %17 = vector.broadcast %c0_i32_3 : i32 to vector<32x128xi32>
    %18 = arith.cmpi eq, %16, %17 : vector<32x128xi32>
    %c15_i32 = arith.constant 15 : i32
    %19 = vector.broadcast %c15_i32 : i32 to vector<32x128xi32>
    %20 = arith.cmpi eq, %16, %19 : vector<32x128xi32>
    %c0 = arith.constant 0 : index
    %c0_4 = arith.constant 0 : index
    %21 = vector.load %arg0[%c0, %c0_4] : memref<32x128xf32, #tpu.memory_space<vmem>>, vector<32x128xf32>
    %c1_i32_5 = arith.constant 1 : i32
    %22 = tpu.dynamic_rotate %21 by %c1_i32_5 dim 0 : vector<32x128xf32>, i32 -> vector<32x128xf32>
    %cst = arith.constant 0.000000e+00 : f32
    %23 = vector.broadcast %cst : f32 to vector<32x128xf32>
    %24 = arith.select %18, %23, %22 : vector<32x128xi1>, vector<32x128xf32>
    %c31_i32 = arith.constant 31 : i32
    %25 = tpu.dynamic_rotate %21 by %c31_i32 dim 0 : vector<32x128xf32>, i32 -> vector<32x128xf32>
    %cst_6 = arith.constant 0.000000e+00 : f32
    %26 = vector.broadcast %cst_6 : f32 to vector<32x128xf32>
    %27 = arith.select %20, %26, %25 : vector<32x128xi1>, vector<32x128xf32>
    %28 = tpu.concatenate %24, %21, %27 in 1 : vector<32x128xf32>, vector<32x128xf32>, vector<32x128xf32> -> vector<32x384xf32>
    %29 = arith.truncf %28 : vector<32x384xf32> to vector<32x384xbf16>
    %c0_7 = arith.constant 0 : index
    %c0_8 = arith.constant 0 : index
    %30 = vector.load %arg1[%c0_7, %c0_8] : memref<384x128xbf16, #tpu.memory_space<vmem>>, vector<384x128xbf16>
    %cst_9 = arith.constant dense<0.000000e+00> : vector<32x128xf32>
    %31 = tpu.matmul %29, %30, %cst_9 {dimension_numbers = #tpu.dot_dimension_numbers<[1], [0], [0], [1], [0, 0, 1, 1], [], []>} : vector<32x384xbf16>, vector<384x128xbf16>, vector<32x128xf32> -> vector<32x128xf32>
    %c0_10 = arith.constant 0 : index
    %c0_11 = arith.constant 0 : index
    %32 = vector.load %arg2[%c0_10, %c0_11] : memref<1x128xf32, #tpu.memory_space<vmem>>, vector<1x128xf32>
    %c0_12 = arith.constant 0 : index
    %c0_13 = arith.constant 0 : index
    %33 = vector.load %arg3[%c0_12, %c0_13] : memref<1x128xf32, #tpu.memory_space<vmem>>, vector<1x128xf32>
    %cst_14 = arith.constant dense<0.000000e+00> : vector<128xf32>
    %34 = vector.multi_reduction <add>, %31, %cst_14 [0] : vector<32x128xf32> to vector<128xf32>
    %35 = vector.shape_cast %34 : vector<128xf32> to vector<1x128xf32>
    %36 = arith.mulf %31, %31 : vector<32x128xf32>
    %cst_15 = arith.constant dense<0.000000e+00> : vector<128xf32>
    %37 = vector.multi_reduction <add>, %36, %cst_15 [0] : vector<32x128xf32> to vector<128xf32>
    %38 = vector.shape_cast %37 : vector<128xf32> to vector<1x128xf32>
    %39 = tpu.concatenate %35, %38 in 0 : vector<1x128xf32>, vector<1x128xf32> -> vector<2x128xf32>
    %c0_16 = arith.constant 0 : index
    %c0_17 = arith.constant 0 : index
    %40 = vector.load %arg7[%c0_16, %c0_17] : memref<128x128xf32, #tpu.memory_space<vmem>>, vector<128x128xf32>
    %cst_18 = arith.constant dense<0.000000e+00> : vector<2x128xf32>
    %41 = tpu.matmul %39, %40, %cst_18 {dimension_numbers = #tpu.dot_dimension_numbers<[1], [0], [0], [1], [0, 0, 1, 1], [], []>} : vector<2x128xf32>, vector<128x128xf32>, vector<2x128xf32> -> vector<2x128xf32>
    %42 = vector.extract_strided_slice %41 {offsets = [0, 0], sizes = [1, 128], strides = [1, 1]} : vector<2x128xf32> to vector<1x128xf32>
    %43 = vector.extract_strided_slice %41 {offsets = [1, 0], sizes = [1, 128], strides = [1, 1]} : vector<2x128xf32> to vector<1x128xf32>
    %44 = arith.mulf %42, %42 : vector<1x128xf32>
    %45 = arith.subf %43, %44 : vector<1x128xf32>
    %cst_19 = arith.constant 9.99999974E-6 : f32
    %46 = vector.broadcast %cst_19 : f32 to vector<1x128xf32>
    %47 = arith.addf %45, %46 : vector<1x128xf32>
    %48 = math.rsqrt %47 : vector<1x128xf32>
    %49 = vector.broadcast %42 : vector<1x128xf32> to vector<32x128xf32>
    %50 = arith.subf %31, %49 : vector<32x128xf32>
    %51 = arith.mulf %48, %32 : vector<1x128xf32>
    %52 = vector.broadcast %51 : vector<1x128xf32> to vector<32x128xf32>
    %53 = arith.mulf %50, %52 : vector<32x128xf32>
    %54 = vector.broadcast %33 : vector<1x128xf32> to vector<32x128xf32>
    %55 = arith.addf %53, %54 : vector<32x128xf32>
    %cst_20 = arith.constant 0.000000e+00 : f32
    %56 = vector.broadcast %cst_20 : f32 to vector<32x128xf32>
    %57 = arith.maximumf %55, %56 : vector<32x128xf32>
    %c1_i32_21 = arith.constant 1 : i32
    %58 = tpu.dynamic_rotate %57 by %c1_i32_21 dim 0 : vector<32x128xf32>, i32 -> vector<32x128xf32>
    %cst_22 = arith.constant 0.000000e+00 : f32
    %59 = vector.broadcast %cst_22 : f32 to vector<32x128xf32>
    %60 = arith.select %18, %59, %58 : vector<32x128xi1>, vector<32x128xf32>
    %c31_i32_23 = arith.constant 31 : i32
    %61 = tpu.dynamic_rotate %57 by %c31_i32_23 dim 0 : vector<32x128xf32>, i32 -> vector<32x128xf32>
    %cst_24 = arith.constant 0.000000e+00 : f32
    %62 = vector.broadcast %cst_24 : f32 to vector<32x128xf32>
    %63 = arith.select %20, %62, %61 : vector<32x128xi1>, vector<32x128xf32>
    %64 = tpu.concatenate %60, %57, %63 in 1 : vector<32x128xf32>, vector<32x128xf32>, vector<32x128xf32> -> vector<32x384xf32>
    %65 = arith.truncf %64 : vector<32x384xf32> to vector<32x384xbf16>
    %c0_25 = arith.constant 0 : index
    %c0_26 = arith.constant 0 : index
    %66 = vector.load %arg4[%c0_25, %c0_26] : memref<384x128xbf16, #tpu.memory_space<vmem>>, vector<384x128xbf16>
    %cst_27 = arith.constant dense<0.000000e+00> : vector<32x128xf32>
    %67 = tpu.matmul %65, %66, %cst_27 {dimension_numbers = #tpu.dot_dimension_numbers<[1], [0], [0], [1], [0, 0, 1, 1], [], []>} : vector<32x384xbf16>, vector<384x128xbf16>, vector<32x128xf32> -> vector<32x128xf32>
    %c0_28 = arith.constant 0 : index
    %c0_29 = arith.constant 0 : index
    %68 = vector.load %arg5[%c0_28, %c0_29] : memref<1x128xf32, #tpu.memory_space<vmem>>, vector<1x128xf32>
    %c0_30 = arith.constant 0 : index
    %c0_31 = arith.constant 0 : index
    %69 = vector.load %arg6[%c0_30, %c0_31] : memref<1x128xf32, #tpu.memory_space<vmem>>, vector<1x128xf32>
    %cst_32 = arith.constant dense<0.000000e+00> : vector<128xf32>
    %70 = vector.multi_reduction <add>, %67, %cst_32 [0] : vector<32x128xf32> to vector<128xf32>
    %71 = vector.shape_cast %70 : vector<128xf32> to vector<1x128xf32>
    %72 = arith.mulf %67, %67 : vector<32x128xf32>
    %cst_33 = arith.constant dense<0.000000e+00> : vector<128xf32>
    %73 = vector.multi_reduction <add>, %72, %cst_33 [0] : vector<32x128xf32> to vector<128xf32>
    %74 = vector.shape_cast %73 : vector<128xf32> to vector<1x128xf32>
    %75 = tpu.concatenate %71, %74 in 0 : vector<1x128xf32>, vector<1x128xf32> -> vector<2x128xf32>
    %c0_34 = arith.constant 0 : index
    %c0_35 = arith.constant 0 : index
    %76 = vector.load %arg7[%c0_34, %c0_35] : memref<128x128xf32, #tpu.memory_space<vmem>>, vector<128x128xf32>
    %cst_36 = arith.constant dense<0.000000e+00> : vector<2x128xf32>
    %77 = tpu.matmul %75, %76, %cst_36 {dimension_numbers = #tpu.dot_dimension_numbers<[1], [0], [0], [1], [0, 0, 1, 1], [], []>} : vector<2x128xf32>, vector<128x128xf32>, vector<2x128xf32> -> vector<2x128xf32>
    %78 = vector.extract_strided_slice %77 {offsets = [0, 0], sizes = [1, 128], strides = [1, 1]} : vector<2x128xf32> to vector<1x128xf32>
    %79 = vector.extract_strided_slice %77 {offsets = [1, 0], sizes = [1, 128], strides = [1, 1]} : vector<2x128xf32> to vector<1x128xf32>
    %80 = arith.mulf %78, %78 : vector<1x128xf32>
    %81 = arith.subf %79, %80 : vector<1x128xf32>
    %cst_37 = arith.constant 9.99999974E-6 : f32
    %82 = vector.broadcast %cst_37 : f32 to vector<1x128xf32>
    %83 = arith.addf %81, %82 : vector<1x128xf32>
    %84 = math.rsqrt %83 : vector<1x128xf32>
    %85 = vector.broadcast %78 : vector<1x128xf32> to vector<32x128xf32>
    %86 = arith.subf %67, %85 : vector<32x128xf32>
    %87 = arith.mulf %84, %68 : vector<1x128xf32>
    %88 = vector.broadcast %87 : vector<1x128xf32> to vector<32x128xf32>
    %89 = arith.mulf %86, %88 : vector<32x128xf32>
    %90 = vector.broadcast %69 : vector<1x128xf32> to vector<32x128xf32>
    %91 = arith.addf %89, %90 : vector<32x128xf32>
    %c0_38 = arith.constant 0 : index
    %c0_39 = arith.constant 0 : index
    %92 = vector.load %arg0[%c0_38, %c0_39] : memref<32x128xf32, #tpu.memory_space<vmem>>, vector<32x128xf32>
    %93 = arith.addf %91, %92 : vector<32x128xf32>
    %cst_40 = arith.constant 0.000000e+00 : f32
    %94 = vector.broadcast %cst_40 : f32 to vector<32x128xf32>
    %95 = arith.maximumf %93, %94 : vector<32x128xf32>
    %c0_41 = arith.constant 0 : index
    %c0_42 = arith.constant 0 : index
    %96 = vector.load %arg8[%c0_41, %c0_42] : memref<32x128xf32, #tpu.memory_space<vmem>>, vector<32x128xf32>
    tpu.vector_store %arg8[%c0_41, %c0_42], %95 {strides = array<i32>} : memref<32x128xf32, #tpu.memory_space<vmem>>, vector<32x128xf32>,
    return
  }
}

</mosaic_0001>

<llo_original>
// kernel: tpu_custom_call.1
$region0: #{tpu_custom_call.1}
  #allocation0 [shape = 'u32[]', space=smem, size = 0x4, offset = 0x4, fixed_abs, tag = 'smem constant byte address 0x4 - core index']
  #allocation1 [shape = 'u32[144,128]{1,0:T(1,128)}', space=vmem, size = 0x12000, scoped, tag = 'internal scratch']
  %s0 = inlined_call_operand.hbm [shape: f32[32,128], index: 0, kind: input, shape index: {}]
  %s1 = inlined_call_operand.hbm [shape: bf16[384,128], index: 1, kind: input, shape index: {}]
  %s2 = inlined_call_operand.vmem [shape: f32[1,128], index: 2, kind: input, shape index: {}]
  %s3 = inlined_call_operand.vmem [shape: f32[1,128], index: 3, kind: input, shape index: {}]
  %s4 = inlined_call_operand.hbm [shape: bf16[384,128], index: 4, kind: input, shape index: {}]
  %s5 = inlined_call_operand.vmem [shape: f32[1,128], index: 5, kind: input, shape index: {}]
  %s6 = inlined_call_operand.vmem [shape: f32[1,128], index: 6, kind: input, shape index: {}]
  %s7 = inlined_call_operand.hbm [shape: f32[128,128], index: 7, kind: input, shape index: {}]
  %s8 = inlined_call_operand.hbm [shape: f32[32,128], index: 8, kind: output, shape index: {}]
  %s9 = sld [smem:[#allocation0]]
  $region58: #{tpu_custom_call.1} parent=0
    _
  %s11 = ssub.s32 1, %s9
  %s12 = scalar_select 0, %s11, %s9
  $region1: #{tpu_custom_call.1} parent=0
    #allocation2 [shape = 'u8[16384]{0}', space=vmem, size = 0x4000, scoped, tag = 'input window, operand 0, single buffered']
    #allocation3 [shape = 's32[1]{0}', space=sflag, size = 0x4, scoped, tag = 'scoped memory for tpu_custom_call.1']
    #allocation4 [shape = 's32[1]{0}', space=sflag, size = 0x4, scoped, tag = 'scoped memory for tpu_custom_call.1']
    #allocation5 [shape = 'u8[98304]{0}', space=vmem, size = 0x18000, scoped, tag = 'input window, operand 1, single buffered']
    #allocation6 [shape = 's32[1]{0}', space=sflag, size = 0x4, scoped, tag = 'scoped memory for tpu_custom_call.1']
    #allocation7 [shape = 'u8[98304]{0}', space=vmem, size = 0x18000, scoped, tag = 'input window, operand 4, single buffered']
    #allocation8 [shape = 'u8[65536]{0}', space=vmem, size = 0x10000, scoped, tag = 'input window, operand 7, single buffered']
    #allocation9 [shape = 's32[1]{0}', space=sflag, size = 0x4, scoped, tag = 'scoped memory for tpu_custom_call.1']
    #allocation10 [shape = 'u8[16384]{0}', space=vmem, size = 0x4000, scoped, tag = 'output window, operand 0, single buffered']
    %13 = vsyncpa [#allocation3], 0
    %14 = vsyncpa [#allocation6], 0
    %15 = vsyncpa [#allocation9], 0
    %16 = vsyncpa [#allocation4], 0
    // Predicated region
    $region2: #{tpu_custom_call.1} parent=1 // pred_check
      _
    $region3: #{tpu_custom_call.1} parent=1 // pred_check_branch
      %18 = sbr.rel (0) target = $region5
    $region4: #{tpu_custom_call.1} parent=1 // pred_region
      %s20 = ssub.s32 512, 512
      %21 = vsyncadd [#allocation3], %s20
      %s22 = sshll.u32 [#allocation2], 4
      %s23 = int_to_ptr.vmem [resolvable:$true] %s22
      %28 = dma.hbm_to_vmem [thread:$0]  %s0, 512, %s23, [#allocation3], 128, 128, 8
    $region5: #{tpu_custom_call.1} parent=1 // pred_fallthru
      _
    // Predicated region
    $region6: #{tpu_custom_call.1} parent=1 // pred_check
      _
    $region7: #{tpu_custom_call.1} parent=1 // pred_check_branch
      %30 = sbr.rel (0) target = $region9
    $region8: #{tpu_custom_call.1} parent=1 // pred_region
      %s32 = ssub.s32 3072, 3072
      %33 = vsyncadd [#allocation6], %s32
      %s34 = sshll.u32 [#allocation5], 4
      %s35 = int_to_ptr.vmem [resolvable:$true] %s34
      %40 = dma.hbm_to_vmem [thread:$0]  %s1, 3072, %s35, [#allocation6], 64, 64, 4
    $region9: #{tpu_custom_call.1} parent=1 // pred_fallthru
      _
    // Predicated region
    $region10: #{tpu_custom_call.1} parent=1 // pred_check
      _
    $region11: #{tpu_custom_call.1} parent=1 // pred_check_branch
      %42 = sbr.rel (0) target = $region13
    $region12: #{tpu_custom_call.1} parent=1 // pred_region
      _
    $region13: #{tpu_custom_call.1} parent=1 // pred_fallthru
      _
    // Predicated region
    $region14: #{tpu_custom_call.1} parent=1 // pred_check
      _
    $region15: #{tpu_custom_call.1} parent=1 // pred_check_branch
      %44 = sbr.rel (0) target = $region17
    $region16: #{tpu_custom_call.1} parent=1 // pred_region
      _
    $region17: #{tpu_custom_call.1} parent=1 // pred_fallthru
      _
    // Predicated region
    $region18: #{tpu_custom_call.1} parent=1 // pred_check
      _
    $region19: #{tpu_custom_call.1} parent=1 // pred_check_branch
      %46 = sbr.rel (0) target = $region21
    $region20: #{tpu_custom_call.1} parent=1 // pred_region
      %s48 = ssub.s32 3072, 3072
      %49 = vsyncadd [#allocation6], %s48
      %s50 = sshll.u32 [#allocation7], 4
      %s51 = int_to_ptr.vmem [resolvable:$true] %s50
      %56 = dma.hbm_to_vmem [thread:$0]  %s4, 3072, %s51, [#allocation6], 64, 64, 4
    $region21: #{tpu_custom_call.1} parent=1 // pred_fallthru
      _
    // Predicated region
    $region22: #{tpu_custom_call.1} parent=1 // pred_check
      _
    $region23: #{tpu_custom_call.1} parent=1 // pred_check_branch
      %58 = sbr.rel (0) target = $region25
    $region24: #{tpu_custom_call.1} parent=1 // pred_region
      _
    $region25: #{tpu_custom_call.1} parent=1 // pred_fallthru
      _
    // Predicated region
    $region26: #{tpu_custom_call.1} parent=1 // pred_check
      _
    $region27: #{tpu_custom_call.1} parent=1 // pred_check_branch
      %60 = sbr.rel (0) target = $region29
    $region28: #{tpu_custom_call.1} parent=1 // pred_region
      _
    $region29: #{tpu_custom_call.1} parent=1 // pred_fallthru
      _
    // Predicated region
    $region30: #{tpu_custom_call.1} parent=1 // pred_check
      _
    $region31: #{tpu_custom_call.1} parent=1 // pred_check_branch
      %62 = sbr.rel (0) target = $region33
    $region32: #{tpu_custom_call.1} parent=1 // pred_region
      %s64 = ssub.s32 2048, 2048
      %65 = vsyncadd [#allocation9], %s64
      %s66 = sshll.u32 [#allocation8], 4
      %s67 = int_to_ptr.vmem [resolvable:$true] %s66
      %72 = dma.hbm_to_vmem [thread:$0]  %s7, 2048, %s67, [#allocation9], 128, 128, 8
    $region33: #{tpu_custom_call.1} parent=1 // pred_fallthru
      _
    // Predicated region
    $region34: #{tpu_custom_call.1} parent=1 // pred_check
      _
    $region35: #{tpu_custom_call.1} parent=1 // pred_check_branch
      %74 = sbr.rel (0) target = $region37
    $region36: #{tpu_custom_call.1} parent=1 // pred_region
      %75 = dma.done [#allocation3], 512
    $region37: #{tpu_custom_call.1} parent=1 // pred_fallthru
      _
    // Predicated region
    $region38: #{tpu_custom_call.1} parent=1 // pred_check
      _
    $region39: #{tpu_custom_call.1} parent=1 // pred_check_branch
      %77 = sbr.rel (0) target = $region41
    $region40: #{tpu_custom_call.1} parent=1 // pred_region
      %78 = dma.done [#allocation6], 3072
    $region41: #{tpu_custom_call.1} parent=1 // pred_fallthru
      _
    // Predicated region
    $region42: #{tpu_custom_call.1} parent=1 // pred_check
      _
    $region43: #{tpu_custom_call.1} parent=1 // pred_check_branch
      %80 = sbr.rel (0) target = $region45
    $region44: #{tpu_custom_call.1} parent=1 // pred_region
      %81 = dma.done [#allocation6], 3072
    $region45: #{tpu_custom_call.1} parent=1 // pred_fallthru
      _
    // Predicated region
    $region46: #{tpu_custom_call.1} parent=1 // pred_check
      _
    $region47: #{tpu_custom_call.1} parent=1 // pred_check_branch
      %83 = sbr.rel (0) target = $region49
    $region48: #{tpu_custom_call.1} parent=1 // pred_region
      %84 = dma.done [#allocation9], 2048
    $region49: #{tpu_custom_call.1} parent=1 // pred_fallthru
      _
    %v86 = vlaneseq
    %v87 = vshrl.u32 %v86, 7
    %v88 = vadd.s32 %v87, 8
    %v89 = vadd.s32 %v87, 16
    %v90 = vadd.s32 %v87, 24
    %vm91 = vcmp.lt.s32.totalorder %v87, 0
    %v92 = vsub.s32 0, %v87
    %v93 = vsel %vm91, %v92, %v87
    %v94 = vshrl.u32 %v93, 4
    %v95 = vand.u32 %v93, 15
    %v96 = vsub.s32 0, %v95
    %v97 = vsel %vm91, %v96, %v95
    %vm98 = vcmp.lt.s32.totalorder %v88, 0
    %v99 = vsub.s32 0, %v88
    %v100 = vsel %vm98, %v99, %v88
    %v101 = vshrl.u32 %v100, 4
    %v102 = vand.u32 %v100, 15
    %v103 = vsub.s32 0, %v102
    %v104 = vsel %vm98, %v103, %v102
    %vm105 = vcmp.lt.s32.totalorder %v89, 0
    %v106 = vsub.s32 0, %v89
    %v107 = vsel %vm105, %v106, %v89
    %v108 = vshrl.u32 %v107, 4
    %v109 = vand.u32 %v107, 15
    %v110 = vsub.s32 0, %v109
    %v111 = vsel %vm105, %v110, %v109
    %vm112 = vcmp.lt.s32.totalorder %v90, 0
    %v113 = vsub.s32 0, %v90
    %v114 = vsel %vm112, %v113, %v90
    %v115 = vshrl.u32 %v114, 4
    %v116 = vand.u32 %v114, 15
    %v117 = vsub.s32 0, %v116
    %v118 = vsel %vm112, %v117, %v116
    %vm119 = vcmp.ne.s32.totalorder %v97, 0
    %vm120 = vcmp.ne.s32.totalorder %v104, 0
    %vm121 = vcmp.ne.s32.totalorder %v111, 0
    %vm122 = vcmp.ne.s32.totalorder %v118, 0
    %vm123 = vcmp.lt.s32.totalorder %v97, 0
    %vm124 = vcmp.lt.s32.totalorder %v104, 0
    %vm125 = vcmp.lt.s32.totalorder %v111, 0
    %vm126 = vcmp.lt.s32.totalorder %v118, 0
    %vm127 = vmand %vm123, %vm119
    %vm128 = vmand %vm124, %vm120
    %vm129 = vmand %vm125, %vm121
    %vm130 = vmand %vm126, %vm122
    %v131 = vadd.s32 %v97, 16
    %v132 = vadd.s32 %v104, 16
    %v133 = vadd.s32 %v111, 16
    %v134 = vadd.s32 %v118, 16
    %v135 = vsel %vm127, %v131, %v97
    %v136 = vsel %vm128, %v132, %v104
    %v137 = vsel %vm129, %v133, %v111
    %v138 = vsel %vm130, %v134, %v118
    %vm139 = vcmp.eq.s32.totalorder %v135, 0
    %vm140 = vcmp.eq.s32.totalorder %v136, 0
    %vm141 = vcmp.eq.s32.totalorder %v137, 0
    %vm142 = vcmp.eq.s32.totalorder %v138, 0
    %vm143 = vcmp.eq.s32.totalorder %v135, 15
    %vm144 = vcmp.eq.s32.totalorder %v136, 15
    %vm145 = vcmp.eq.s32.totalorder %v137, 15
    %vm146 = vcmp.eq.s32.totalorder %v138, 15
    %v147 = vld [vmem:[#allocation2] sm:$0xff]
    %v148 = vld [vmem:[#allocation2 + $0x8] sm:$0xff]
    %v149 = vld [vmem:[#allocation2 + $0x10] sm:$0xff]
    %v150 = vld [vmem:[#allocation2 + $0x18] sm:$0xff]
    %v151 = vrot.slane %v147, 7
    %v152 = vrot.slane %v148, 7
    %v153 = vrot.slane %v149, 7
    %v154 = vrot.slane %v150, 7
    %vm155 = vcmp.lt.s32.totalorder %v87, 1
    %v156 = vsel %vm155, %v153, %v154
    %v157 = vsel %vm155, %v152, %v153
    %v158 = vsel %vm155, %v151, %v152
    %v159 = vsel %vm155, %v154, %v151
    %v160 = vsel %vm139, 0.0, %v159
    %v161 = vsel %vm140, 0.0, %v158
    %v162 = vsel %vm141, 0.0, %v157
    %v163 = vsel %vm142, 0.0, %v156
    %v164 = vrot.slane %v147, 1
    %v165 = vrot.slane %v148, 1
    %v166 = vrot.slane %v149, 1
    %v167 = vrot.slane %v150, 1
    %vm168 = vcmp.lt.s32.totalorder %v87, 7
    %v169 = vsel %vm168, %v166, %v167
    %v170 = vsel %vm168, %v165, %v166
    %v171 = vsel %vm168, %v164, %v165
    %v172 = vsel %vm168, %v167, %v164
    %v173 = vsel %vm143, 0.0, %v171
    %v174 = vsel %vm144, 0.0, %v170
    %v175 = vsel %vm145, 0.0, %v169
    %v176 = vsel %vm146, 0.0, %v172
    %v177 = vpack.c.bf16 %v161, %v160
    %v178 = vpack.c.bf16 %v148, %v147
    %v179 = vpack.c.bf16 %v174, %v173
    %v180 = vpack.c.bf16 %v163, %v162
    %v181 = vpack.c.bf16 %v150, %v149
    %v182 = vpack.c.bf16 %v176, %v175
    %v183 = vld [vmem:[#allocation5] sm:$0xf]
    %v184 = vld [vmem:[#allocation5 + $0x4] sm:$0xf]
    %v185 = vld [vmem:[#allocation5 + $0x8] sm:$0xf]
    %v186 = vld [vmem:[#allocation5 + $0xc] sm:$0xf]
    %v187 = vld [vmem:[#allocation5 + $0x10] sm:$0xf]
    %v188 = vld [vmem:[#allocation5 + $0x14] sm:$0xf]
    %v189 = vld [vmem:[#allocation5 + $0x18] sm:$0xf]
    %v190 = vld [vmem:[#allocation5 + $0x1c] sm:$0xf]
    %v191 = vld [vmem:[#allocation5 + $0x20] sm:$0xf]
    %v192 = vld [vmem:[#allocation5 + $0x24] sm:$0xf]
    %v193 = vld [vmem:[#allocation5 + $0x28] sm:$0xf]
    %v194 = vld [vmem:[#allocation5 + $0x2c] sm:$0xf]
    %v195 = vld [vmem:[#allocation5 + $0x30] sm:$0xf]
    %v196 = vld [vmem:[#allocation5 + $0x34] sm:$0xf]
    %v197 = vld [vmem:[#allocation5 + $0x38] sm:$0xf]
    %v198 = vld [vmem:[#allocation5 + $0x3c] sm:$0xf]
    %v199 = vld [vmem:[#allocation5 + $0x40] sm:$0xf]
    %v200 = vld [vmem:[#allocation5 + $0x44] sm:$0xf]
    %v201 = vld [vmem:[#allocation5 + $0x48] sm:$0xf]
    %v202 = vld [vmem:[#allocation5 + $0x4c] sm:$0xf]
    %v203 = vld [vmem:[#allocation5 + $0x50] sm:$0xf]
    %v204 = vld [vmem:[#allocation5 + $0x54] sm:$0xf]
    %v205 = vld [vmem:[#allocation5 + $0x58] sm:$0xf]
    %v206 = vld [vmem:[#allocation5 + $0x5c] sm:$0xf]
    %v207 = vld [vmem:[#allocation5 + $0x60] sm:$0xf]
    %v208 = vld [vmem:[#allocation5 + $0x64] sm:$0xf]
    %v209 = vld [vmem:[#allocation5 + $0x68] sm:$0xf]
    %v210 = vld [vmem:[#allocation5 + $0x6c] sm:$0xf]
    %v211 = vld [vmem:[#allocation5 + $0x70] sm:$0xf]
    %v212 = vld [vmem:[#allocation5 + $0x74] sm:$0xf]
    %v213 = vld [vmem:[#allocation5 + $0x78] sm:$0xf]
    %v214 = vld [vmem:[#allocation5 + $0x7c] sm:$0xf]
    %v215 = vld [vmem:[#allocation5 + $0x80] sm:$0xf]
    %v216 = vld [vmem:[#allocation5 + $0x84] sm:$0xf]
    %v217 = vld [vmem:[#allocation5 + $0x88] sm:$0xf]
    %v218 = vld [vmem:[#allocation5 + $0x8c] sm:$0xf]
    %v219 = vld [vmem:[#allocation5 + $0x90] sm:$0xf]
    %v220 = vld [vmem:[#allocation5 + $0x94] sm:$0xf]
    %v221 = vld [vmem:[#allocation5 + $0x98] sm:$0xf]
    %v222 = vld [vmem:[#allocation5 + $0x9c] sm:$0xf]
    %v223 = vld [vmem:[#allocation5 + $0xa0] sm:$0xf]
    %v224 = vld [vmem:[#allocation5 + $0xa4] sm:$0xf]
    %v225 = vld [vmem:[#allocation5 + $0xa8] sm:$0xf]
    %v226 = vld [vmem:[#allocation5 + $0xac] sm:$0xf]
    %v227 = vld [vmem:[#allocation5 + $0xb0] sm:$0xf]
    %v228 = vld [vmem:[#allocation5 + $0xb4] sm:$0xf]
    %v229 = vld [vmem:[#allocation5 + $0xb8] sm:$0xf]
    %v230 = vld [vmem:[#allocation5 + $0xbc] sm:$0xf]
    %v279 = vunpack.c.l.b16 %v183
    %v280 = vunpack.c.l.b16 %v184
    %v281 = vunpack.c.l.b16 %v185
    %v282 = vunpack.c.l.b16 %v186
    %v283 = vunpack.c.l.b16 %v187
    %v284 = vunpack.c.l.b16 %v188
    %v285 = vunpack.c.l.b16 %v189
    %v286 = vunpack.c.l.b16 %v190
    %v287 = vunpack.c.l.b16 %v191
    %v288 = vunpack.c.l.b16 %v192
    %v289 = vunpack.c.l.b16 %v193
    %v290 = vunpack.c.l.b16 %v194
    %v291 = vunpack.c.l.b16 %v195
    %v292 = vunpack.c.l.b16 %v196
    %v293 = vunpack.c.l.b16 %v197
    %v294 = vunpack.c.l.b16 %v198
    %v295 = vunpack.c.l.b16 %v199
    %v296 = vunpack.c.l.b16 %v200
    %v297 = vunpack.c.l.b16 %v201
    %v298 = vunpack.c.l.b16 %v202
    %v299 = vunpack.c.l.b16 %v203
    %v300 = vunpack.c.l.b16 %v204
    %v301 = vunpack.c.l.b16 %v205
    %v302 = vunpack.c.l.b16 %v206
    %v303 = vunpack.c.l.b16 %v207
    %v304 = vunpack.c.l.b16 %v208
    %v305 = vunpack.c.l.b16 %v209
    %v306 = vunpack.c.l.b16 %v210
    %v307 = vunpack.c.l.b16 %v211
    %v308 = vunpack.c.l.b16 %v212
    %v309 = vunpack.c.l.b16 %v213
    %v310 = vunpack.c.l.b16 %v214
    %v311 = vunpack.c.l.b16 %v215
    %v312 = vunpack.c.l.b16 %v216
    %v313 = vunpack.c.l.b16 %v217
    %v314 = vunpack.c.l.b16 %v218
    %v315 = vunpack.c.l.b16 %v219
    %v316 = vunpack.c.l.b16 %v220
    %v317 = vunpack.c.l.b16 %v221
    %v318 = vunpack.c.l.b16 %v222
    %v319 = vunpack.c.l.b16 %v223
    %v320 = vunpack.c.l.b16 %v224
    %v321 = vunpack.c.l.b16 %v225
    %v322 = vunpack.c.l.b16 %v226
    %v323 = vunpack.c.l.b16 %v227
    %v324 = vunpack.c.l.b16 %v228
    %v325 = vunpack.c.l.b16 %v229
    %v326 = vunpack.c.l.b16 %v230
    %v327 = vpack.c.b16 %v280, %v279
    %v328 = vpack.c.b16 %v282, %v281
    %v329 = vpack.c.b16 %v284, %v283
    %v330 = vpack.c.b16 %v286, %v285
    %v331 = vpack.c.b16 %v288, %v287
    %v332 = vpack.c.b16 %v290, %v289
    %v333 = vpack.c.b16 %v292, %v291
    %v334 = vpack.c.b16 %v294, %v293
    %v335 = vpack.c.b16 %v296, %v295
    %v336 = vpack.c.b16 %v298, %v297
    %v337 = vpack.c.b16 %v300, %v299
    %v338 = vpack.c.b16 %v302, %v301
    %v339 = vpack.c.b16 %v304, %v303
    %v340 = vpack.c.b16 %v306, %v305
    %v341 = vpack.c.b16 %v308, %v307
    %v342 = vpack.c.b16 %v310, %v309
    %v343 = vpack.c.b16 %v312, %v311
    %v344 = vpack.c.b16 %v314, %v313
    %v345 = vpack.c.b16 %v316, %v315
    %v346 = vpack.c.b16 %v318, %v317
    %v347 = vpack.c.b16 %v320, %v319
    %v348 = vpack.c.b16 %v322, %v321
    %v349 = vpack.c.b16 %v324, %v323
    %v350 = vpack.c.b16 %v326, %v325
    %375 = vmatprep.subr.bf16.mxu0 0
    %376 = vmatpush1.bf16.msra.mxu0 %v327
    %377 = vmatprep.subr.bf16.mxu0 0
    %378 = vmatpush1.bf16.msra.mxu0 %v328
    %379 = vmatprep.subr.bf16.mxu0 0
    %380 = vmatpush1.bf16.msra.mxu0 %v329
    %381 = vmatprep.subr.bf16.mxu0 0
    %382 = vmatpush1.bf16.msra.mxu0 %v330
    %383 = vmatprep.subr.bf16.mxu0 0
    %384 = vmatpush1.bf16.msra.mxu0 %v331
    %385 = vmatprep.subr.bf16.mxu0 0
    %386 = vmatpush1.bf16.msra.mxu0 %v332
    %387 = vmatprep.subr.bf16.mxu0 0
    %388 = vmatpush1.bf16.msra.mxu0 %v333
    %389 = vmatprep.subr.bf16.mxu0 0
    %390 = vmatpush1.bf16.msra.mxu0 %v334
    %391 = vmatprep.subr.bf16.mxu0 0
    %392 = vmatpush1.bf16.msra.mxu0 %v335
    %393 = vmatprep.subr.bf16.mxu0 0
    %394 = vmatpush1.bf16.msra.mxu0 %v336
    %395 = vmatprep.subr.bf16.mxu0 0
    %396 = vmatpush1.bf16.msra.mxu0 %v337
    %397 = vmatprep.subr.bf16.mxu0 0
    %398 = vmatpush1.bf16.msra.mxu0 %v338
    %399 = vmatprep.subr.bf16.mxu0 0
    %400 = vmatpush1.bf16.msra.mxu0 %v339
    %401 = vmatprep.subr.bf16.mxu0 0
    %402 = vmatpush1.bf16.msra.mxu0 %v340
    %403 = vmatprep.subr.bf16.mxu0 0
    %404 = vmatpush1.bf16.msra.mxu0 %v341
    %405 = vmatprep.subr.bf16.mxu0 0
    %406 = vmatpush1.bf16.msra.mxu0 %v342
    %407 = vmatprep.mubr.bf16.mxu0 %v178
    %408 = vmatmul.mubr.bf16.gmra.mrb[0].mxu0 %v177
    %v409 = vpop.f32.mrb[0].mxu0
    %v410 = vadd.f32 0.0, %v409
    %v411 = vpop.f32.mrb[0].mxu0
    %v412 = vpop.f32.mrb[0].mxu0
    %v413 = vadd.f32 0.0, %v412
    %v414 = vpop.f32.mrb[0].mxu0
    %415 = vmatprep.mubr.bf16.mxu0 %v181
    %416 = vmatmul.mubr.bf16.gmra.mrb[0].mxu0 %v180
    %v417 = vpop.f32.mrb[0].mxu0
    %v418 = vadd.f32 0.0, %v417
    %v419 = vpop.f32.mrb[0].mxu0
    %v420 = vpop.f32.mrb[0].mxu0
    %v421 = vadd.f32 0.0, %v420
    %v422 = vpop.f32.mrb[0].mxu0
    %423 = vdwg.mxu0
    %424 = vmatprep.subr.bf16.mxu0 0
    %425 = vmatpush1.bf16.msra.mxu0 %v343
    %426 = vmatprep.subr.bf16.mxu0 0
    %427 = vmatpush1.bf16.msra.mxu0 %v344
    %428 = vmatprep.subr.bf16.mxu0 0
    %429 = vmatpush1.bf16.msra.mxu0 %v345
    %430 = vmatprep.subr.bf16.mxu0 0
    %431 = vmatpush1.bf16.msra.mxu0 %v346
    %432 = vmatprep.subr.bf16.mxu0 0
    %433 = vmatpush1.bf16.msra.mxu0 %v347
    %434 = vmatprep.subr.bf16.mxu0 0
    %435 = vmatpush1.bf16.msra.mxu0 %v348
    %436 = vmatprep.subr.bf16.mxu0 0
    %437 = vmatpush1.bf16.msra.mxu0 %v349
    %438 = vmatprep.subr.bf16.mxu0 0
    %439 = vmatpush1.bf16.msra.mxu0 %v350
    %440 = vmatprep.subr.bf16.mxu0 0
    %441 = vmatpush1.bf16.msra.mxu0 0
    %442 = vmatprep.subr.bf16.mxu0 0
    %443 = vmatpush1.bf16.msra.mxu0 0
    %444 = vmatprep.subr.bf16.mxu0 0
    %445 = vmatpush1.bf16.msra.mxu0 0
    %446 = vmatprep.subr.bf16.mxu0 0
    %447 = vmatpush1.bf16.msra.mxu0 0
    %448 = vmatprep.subr.bf16.mxu0 0
    %449 = vmatpush1.bf16.msra.mxu0 0
    %450 = vmatprep.subr.bf16.mxu0 0
    %451 = vmatpush1.bf16.msra.mxu0 0
    %452 = vmatprep.subr.bf16.mxu0 0
    %453 = vmatpush1.bf16.msra.mxu0 0
    %454 = vmatprep.subr.bf16.mxu0 0
    %455 = vmatpush1.bf16.msra.mxu0 0
    %456 = vmatprep.mubr.bf16.mxu0 0
    %457 = vmatmul.mubr.bf16.gmra.mrb[0].mxu0 %v179
    %v458 = vpop.f32.mrb[0].mxu0
    %v459 = vadd.f32 %v410, %v458
    %v460 = vpop.f32.mrb[0].mxu0
    %v461 = vpop.f32.mrb[0].mxu0
    %v462 = vadd.f32 %v413, %v461
    %v463 = vpop.f32.mrb[0].mxu0
    %464 = vmatprep.mubr.bf16.mxu0 0
    %465 = vmatmul.mubr.bf16.gmra.mrb[0].mxu0 %v182
    %v466 = vpop.f32.mrb[0].mxu0
    %v467 = vadd.f32 %v418, %v466
    %v468 = vpop.f32.mrb[0].mxu0
    %v469 = vpop.f32.mrb[0].mxu0
    %v470 = vadd.f32 %v421, %v469
    %v471 = vpop.f32.mrb[0].mxu0
    %472 = vdwg.mxu0
    %v473 = vld [vmem:[%s2] sm:$0x1]
    %v474 = vld [vmem:[%s3] sm:$0x1]
    %v475 = vadd.f32 %v459, %v462
    %v476 = vadd.f32 %v475, %v467
    %v477 = vadd.f32 %v476, %v470
    %v478 = vrot.slane %v477, 4
    %v479 = vadd.f32 %v477, %v478
    %v480 = vrot.slane %v479, 2
    %v481 = vadd.f32 %v479, %v480
    %v482 = vrot.slane %v481, 1
    %v483 = vadd.f32 %v481, %v482
    %v484 = vmul.f32 %v459, %v459
    %v485 = vmul.f32 %v462, %v462
    %v486 = vmul.f32 %v467, %v467
    %v487 = vmul.f32 %v470, %v470
    %v488 = vadd.f32 %v484, %v485
    %v489 = vadd.f32 %v488, %v486
    %v490 = vadd.f32 %v489, %v487
    %v491 = vrot.slane %v490, 4
    %v492 = vadd.f32 %v490, %v491
    %v493 = vrot.slane %v492, 2
    %v494 = vadd.f32 %v492, %v493
    %v495 = vrot.slane %v494, 1
    %v496 = vadd.f32 %v494, %v495
    %vm497 = vcmask 1040384
    %v498 = vsel %vm497, %v483, %v496
    %v499 = vld [vmem:[#allocation8] sm:$0xff]
    %v500 = vld [vmem:[#allocation8 + $0x8] sm:$0xff]
    %v501 = vld [vmem:[#allocation8 + $0x10] sm:$0xff]
    %v502 = vld [vmem:[#allocation8 + $0x18] sm:$0xff]
    %v503 = vld [vmem:[#allocation8 + $0x20] sm:$0xff]
    %v504 = vld [vmem:[#allocation8 + $0x28] sm:$0xff]
    %v505 = vld [vmem:[#allocation8 + $0x30] sm:$0xff]
    %v506 = vld [vmem:[#allocation8 + $0x38] sm:$0xff]
    %v507 = vld [vmem:[#allocation8 + $0x40] sm:$0xff]
    %v508 = vld [vmem:[#allocation8 + $0x48] sm:$0xff]
    %v509 = vld [vmem:[#allocation8 + $0x50] sm:$0xff]
    %v510 = vld [vmem:[#allocation8 + $0x58] sm:$0xff]
    %v511 = vld [vmem:[#allocation8 + $0x60] sm:$0xff]
    %v512 = vld [vmem:[#allocation8 + $0x68] sm:$0xff]
    %v513 = vld [vmem:[#allocation8 + $0x70] sm:$0xff]
    %v514 = vld [vmem:[#allocation8 + $0x78] sm:$0xff]
    %515 = vmatprep.subr.mxu0 0.0
    %516 = vmatpush1.msra.mxu0 %v499
    %517 = vmatprep.subr.mxu0 0.0
    %518 = vmatpush1.msra.mxu0 %v500
    %519 = vmatprep.subr.mxu0 0.0
    %520 = vmatpush1.msra.mxu0 %v501
    %521 = vmatprep.subr.mxu0 0.0
    %522 = vmatpush1.msra.mxu0 %v502
    %523 = vmatprep.subr.mxu0 0.0
    %524 = vmatpush1.msra.mxu0 %v503
    %525 = vmatprep.subr.mxu0 0.0
    %526 = vmatpush1.msra.mxu0 %v504
    %527 = vmatprep.subr.mxu0 0.0
    %528 = vmatpush1.msra.mxu0 %v505
    %529 = vmatprep.subr.mxu0 0.0
    %530 = vmatpush1.msra.mxu0 %v506
    %531 = vmatprep.subr.mxu0 0.0
    %532 = vmatpush1.msra.mxu0 %v507
    %533 = vmatprep.subr.mxu0 0.0
    %534 = vmatpush1.msra.mxu0 %v508
    %535 = vmatprep.subr.mxu0 0.0
    %536 = vmatpush1.msra.mxu0 %v509
    %537 = vmatprep.subr.mxu0 0.0
    %538 = vmatpush1.msra.mxu0 %v510
    %539 = vmatprep.subr.mxu0 0.0
    %540 = vmatpush1.msra.mxu0 %v511
    %541 = vmatprep.subr.mxu0 0.0
    %542 = vmatpush1.msra.mxu0 %v512
    %543 = vmatprep.subr.mxu0 0.0
    %544 = vmatpush1.msra.mxu0 %v513
    %545 = vmatprep.subr.mxu0 0.0
    %546 = vmatpush1.msra.mxu0 %v514
    %547 = vmatprep.subr.mxu0 0.0
    %548 = vmatpush1.msra.mxu0 0.0
    %549 = vmatprep.subr.mxu0 0.0
    %550 = vmatpush1.msra.mxu0 0.0
    %551 = vmatprep.subr.mxu0 0.0
    %552 = vmatpush1.msra.mxu0 0.0
    %553 = vmatprep.subr.mxu0 0.0
    %554 = vmatpush1.msra.mxu0 0.0
    %555 = vmatprep.subr.mxu0 0.0
    %556 = vmatpush1.msra.mxu0 0.0
    %557 = vmatprep.subr.mxu0 0.0
    %558 = vmatpush1.msra.mxu0 0.0
    %559 = vmatprep.subr.mxu0 0.0
    %560 = vmatpush1.msra.mxu0 0.0
    %561 = vmatprep.subr.mxu0 0.0
    %562 = vmatpush1.msra.mxu0 0.0
    %563 = vmatprep.subr.mxu0 0.0
    %564 = vmatpush1.msra.mxu0 0.0
    %565 = vmatprep.subr.mxu0 0.0
    %566 = vmatpush1.msra.mxu0 0.0
    %567 = vmatprep.subr.mxu0 0.0
    %568 = vmatpush1.msra.mxu0 0.0
    %569 = vmatprep.subr.mxu0 0.0
    %570 = vmatpush1.msra.mxu0 0.0
    %571 = vmatprep.subr.mxu0 0.0
    %572 = vmatpush1.msra.mxu0 0.0
    %573 = vmatprep.subr.mxu0 0.0
    %574 = vmatpush1.msra.mxu0 0.0
    %575 = vmatprep.subr.mxu0 0.0
    %576 = vmatpush1.msra.mxu0 0.0
    %577 = vmatprep.subr.mxu0 0.0
    %578 = vmatpush1.msra.mxu0 0.0
    %579 = vmatprep.mubr.f32.mxu0 0.0
    %580 = vmatmul.mubr.f32.gmra.mrb[0].mxu0 %v498
    %v581 = vpop.f32.mrb[0].mxu0
    %v582 = vadd.f32 0.0, %v581
    %v583 = vpop.f32.mrb[0].mxu0
    %584 = vdwg.mxu0
    %v585 = vmul.f32 %v582, %v582
    %v587 = vrot.slane %v585, 7
    %v589 = vsub.f32 %v582, %v587
    %v590 = vadd.f32 %v589, 1e-05
    %v591 = vrsqrt.pop %v590
    %v592 = vlaneseq
    %v593 = vshrl.u32 %v592, 7
    %v594 = vsub.s32 0, %v593
    %v595 = vrot.slane %v582, %v594
    %v596 = vsub.f32 %v459, %v595
    %v597 = vsub.f32 %v462, %v595
    %v598 = vsub.f32 %v467, %v595
    %v599 = vsub.f32 %v470, %v595
    %v601 = vlaneseq
    %v602 = vshrl.u32 %v601, 7
    %v603 = vsub.s32 0, %v602
    %v604 = vrot.slane %v473, %v603
    %v606 = vmul.f32 %v591, %v604
    %v607 = vlaneseq
    %v608 = vshrl.u32 %v607, 7
    %v609 = vsub.s32 1, %v608
    %v610 = vrot.slane %v606, %v609
    %v611 = vmul.f32 %v596, %v610
    %v612 = vmul.f32 %v597, %v610
    %v613 = vmul.f32 %v598, %v610
    %v614 = vmul.f32 %v599, %v610
    %v616 = vlaneseq
    %v617 = vshrl.u32 %v616, 7
    %v618 = vsub.s32 0, %v617
    %v619 = vrot.slane %v474, %v618
    %v621 = vadd.f32 %v611, %v619
    %v622 = vadd.f32 %v612, %v619
    %v623 = vadd.f32 %v613, %v619
    %v624 = vadd.f32 %v614, %v619
    %v625 = vmax.f32 %v621, 0.0
    %v626 = vmax.f32 %v622, 0.0
    %v627 = vmax.f32 %v623, 0.0
    %v628 = vmax.f32 %v624, 0.0
    %v629 = vrot.slane %v625, 7
    %v630 = vrot.slane %v626, 7
    %v631 = vrot.slane %v627, 7
    %v632 = vrot.slane %v628, 7
    %v633 = vsel %vm155, %v631, %v632
    %v634 = vsel %vm155, %v630, %v631
    %v635 = vsel %vm155, %v629, %v630
    %v636 = vsel %vm155, %v632, %v629
    %v637 = vsel %vm139, 0.0, %v636
    %v638 = vsel %vm140, 0.0, %v635
    %v639 = vsel %vm141, 0.0, %v634
    %v640 = vsel %vm142, 0.0, %v633
    %v641 = vrot.slane %v625, 1
    %v642 = vrot.slane %v626, 1
    %v643 = vrot.slane %v627, 1
    %v644 = vrot.slane %v628, 1
    %v645 = vsel %vm168, %v643, %v644
    %v646 = vsel %vm168, %v642, %v643
    %v647 = vsel %vm168, %v641, %v642
    %v648 = vsel %vm168, %v644, %v641
    %v649 = vsel %vm143, 0.0, %v647
    %v650 = vsel %vm144, 0.0, %v646
    %v651 = vsel %vm145, 0.0, %v645
    %v652 = vsel %vm146, 0.0, %v648
    %v653 = vpack.c.bf16 %v638, %v637
    %v654 = vpack.c.bf16 %v626, %v625
    %v655 = vpack.c.bf16 %v650, %v649
    %v656 = vpack.c.bf16 %v640, %v639
    %v657 = vpack.c.bf16 %v628, %v627
    %v658 = vpack.c.bf16 %v652, %v651
    %v659 = vld [vmem:[#allocation7] sm:$0xf]
    %v660 = vld [vmem:[#allocation7 + $0x4] sm:$0xf]
    %v661 = vld [vmem:[#allocation7 + $0x8] sm:$0xf]
    %v662 = vld [vmem:[#allocation7 + $0xc] sm:$0xf]
    %v663 = vld [vmem:[#allocation7 + $0x10] sm:$0xf]
    %v664 = vld [vmem:[#allocation7 + $0x14] sm:$0xf]
    %v665 = vld [vmem:[#allocation7 + $0x18] sm:$0xf]
    %v666 = vld [vmem:[#allocation7 + $0x1c] sm:$0xf]
    %v667 = vld [vmem:[#allocation7 + $0x20] sm:$0xf]
    %v668 = vld [vmem:[#allocation7 + $0x24] sm:$0xf]
    %v669 = vld [vmem:[#allocation7 + $0x28] sm:$0xf]
    %v670 = vld [vmem:[#allocation7 + $0x2c] sm:$0xf]
    %v671 = vld [vmem:[#allocation7 + $0x30] sm:$0xf]
    %v672 = vld [vmem:[#allocation7 + $0x34] sm:$0xf]
    %v673 = vld [vmem:[#allocation7 + $0x38] sm:$0xf]
    %v674 = vld [vmem:[#allocation7 + $0x3c] sm:$0xf]
    %v675 = vld [vmem:[#allocation7 + $0x40] sm:$0xf]
    %v676 = vld [vmem:[#allocation7 + $0x44] sm:$0xf]
    %v677 = vld [vmem:[#allocation7 + $0x48] sm:$0xf]
    %v678 = vld [vmem:[#allocation7 + $0x4c] sm:$0xf]
    %v679 = vld [vmem:[#allocation7 + $0x50] sm:$0xf]
    %v680 = vld [vmem:[#allocation7 + $0x54] sm:$0xf]
    %v681 = vld [vmem:[#allocation7 + $0x58] sm:$0xf]
    %v682 = vld [vmem:[#allocation7 + $0x5c] sm:$0xf]
    %v683 = vld [vmem:[#allocation7 + $0x60] sm:$0xf]
    %v684 = vld [vmem:[#allocation7 + $0x64] sm:$0xf]
    %v685 = vld [vmem:[#allocation7 + $0x68] sm:$0xf]
    %v686 = vld [vmem:[#allocation7 + $0x6c] sm:$0xf]
    %v687 = vld [vmem:[#allocation7 + $0x70] sm:$0xf]
    %v688 = vld [vmem:[#allocation7 + $0x74] sm:$0xf]
    %v689 = vld [vmem:[#allocation7 + $0x78] sm:$0xf]
    %v690 = vld [vmem:[#allocation7 + $0x7c] sm:$0xf]
    %v691 = vld [vmem:[#allocation7 + $0x80] sm:$0xf]
    %v692 = vld [vmem:[#allocation7 + $0x84] sm:$0xf]
    %v693 = vld [vmem:[#allocation7 + $0x88] sm:$0xf]
    %v694 = vld [vmem:[#allocation7 + $0x8c] sm:$0xf]
    %v695 = vld [vmem:[#allocation7 + $0x90] sm:$0xf]
    %v696 = vld [vmem:[#allocation7 + $0x94] sm:$0xf]
    %v697 = vld [vmem:[#allocation7 + $0x98] sm:$0xf]
    %v698 = vld [vmem:[#allocation7 + $0x9c] sm:$0xf]
    %v699 = vld [vmem:[#allocation7 + $0xa0] sm:$0xf]
    %v700 = vld [vmem:[#allocation7 + $0xa4] sm:$0xf]
    %v701 = vld [vmem:[#allocation7 + $0xa8] sm:$0xf]
    %v702 = vld [vmem:[#allocation7 + $0xac] sm:$0xf]
    %v703 = vld [vmem:[#allocation7 + $0xb0] sm:$0xf]
    %v704 = vld [vmem:[#allocation7 + $0xb4] sm:$0xf]
    %v705 = vld [vmem:[#allocation7 + $0xb8] sm:$0xf]
    %v706 = vld [vmem:[#allocation7 + $0xbc] sm:$0xf]
    %v755 = vunpack.c.l.b16 %v659
    %v756 = vunpack.c.l.b16 %v660
    %v757 = vunpack.c.l.b16 %v661
    %v758 = vunpack.c.l.b16 %v662
    %v759 = vunpack.c.l.b16 %v663
    %v760 = vunpack.c.l.b16 %v664
    %v761 = vunpack.c.l.b16 %v665
    %v762 = vunpack.c.l.b16 %v666
    %v763 = vunpack.c.l.b16 %v667
    %v764 = vunpack.c.l.b16 %v668
    %v765 = vunpack.c.l.b16 %v669
    %v766 = vunpack.c.l.b16 %v670
    %v767 = vunpack.c.l.b16 %v671
    %v768 = vunpack.c.l.b16 %v672
    %v769 = vunpack.c.l.b16 %v673
    %v770 = vunpack.c.l.b16 %v674
    %v771 = vunpack.c.l.b16 %v675
    %v772 = vunpack.c.l.b16 %v676
    %v773 = vunpack.c.l.b16 %v677
    %v774 = vunpack.c.l.b16 %v678
    %v775 = vunpack.c.l.b16 %v679
    %v776 = vunpack.c.l.b16 %v680
    %v777 = vunpack.c.l.b16 %v681
    %v778 = vunpack.c.l.b16 %v682
    %v779 = vunpack.c.l.b16 %v683
    %v780 = vunpack.c.l.b16 %v684
    %v781 = vunpack.c.l.b16 %v685
    %v782 = vunpack.c.l.b16 %v686
    %v783 = vunpack.c.l.b16 %v687
    %v784 = vunpack.c.l.b16 %v688
    %v785 = vunpack.c.l.b16 %v689
    %v786 = vunpack.c.l.b16 %v690
    %v787 = vunpack.c.l.b16 %v691
    %v788 = vunpack.c.l.b16 %v692
    %v789 = vunpack.c.l.b16 %v693
    %v790 = vunpack.c.l.b16 %v694
    %v791 = vunpack.c.l.b16 %v695
    %v792 = vunpack.c.l.b16 %v696
    %v793 = vunpack.c.l.b16 %v697
    %v794 = vunpack.c.l.b16 %v698
    %v795 = vunpack.c.l.b16 %v699
    %v796 = vunpack.c.l.b16 %v700
    %v797 = vunpack.c.l.b16 %v701
    %v798 = vunpack.c.l.b16 %v702
    %v799 = vunpack.c.l.b16 %v703
    %v800 = vunpack.c.l.b16 %v704
    %v801 = vunpack.c.l.b16 %v705
    %v802 = vunpack.c.l.b16 %v706
    %v803 = vpack.c.b16 %v756, %v755
    %v804 = vpack.c.b16 %v758, %v757
    %v805 = vpack.c.b16 %v760, %v759
    %v806 = vpack.c.b16 %v762, %v761
    %v807 = vpack.c.b16 %v764, %v763
    %v808 = vpack.c.b16 %v766, %v765
    %v809 = vpack.c.b16 %v768, %v767
    %v810 = vpack.c.b16 %v770, %v769
    %v811 = vpack.c.b16 %v772, %v771
    %v812 = vpack.c.b16 %v774, %v773
    %v813 = vpack.c.b16 %v776, %v775
    %v814 = vpack.c.b16 %v778, %v777
    %v815 = vpack.c.b16 %v780, %v779
    %v816 = vpack.c.b16 %v782, %v781
    %v817 = vpack.c.b16 %v784, %v783
    %v818 = vpack.c.b16 %v786, %v785
    %v819 = vpack.c.b16 %v788, %v787
    %v820 = vpack.c.b16 %v790, %v789
    %v821 = vpack.c.b16 %v792, %v791
    %v822 = vpack.c.b16 %v794, %v793
    %v823 = vpack.c.b16 %v796, %v795
    %v824 = vpack.c.b16 %v798, %v797
    %v825 = vpack.c.b16 %v800, %v799
    %v826 = vpack.c.b16 %v802, %v801
    %851 = vmatprep.subr.bf16.mxu0 0
    %852 = vmatpush1.bf16.msra.mxu0 %v803
    %853 = vmatprep.subr.bf16.mxu0 0
    %854 = vmatpush1.bf16.msra.mxu0 %v804
    %855 = vmatprep.subr.bf16.mxu0 0
    %856 = vmatpush1.bf16.msra.mxu0 %v805
    %857 = vmatprep.subr.bf16.mxu0 0
    %858 = vmatpush1.bf16.msra.mxu0 %v806
    %859 = vmatprep.subr.bf16.mxu0 0
    %860 = vmatpush1.bf16.msra.mxu0 %v807
    %861 = vmatprep.subr.bf16.mxu0 0
    %862 = vmatpush1.bf16.msra.mxu0 %v808
    %863 = vmatprep.subr.bf16.mxu0 0
    %864 = vmatpush1.bf16.msra.mxu0 %v809
    %865 = vmatprep.subr.bf16.mxu0 0
    %866 = vmatpush1.bf16.msra.mxu0 %v810
    %867 = vmatprep.subr.bf16.mxu0 0
    %868 = vmatpush1.bf16.msra.mxu0 %v811
    %869 = vmatprep.subr.bf16.mxu0 0
    %870 = vmatpush1.bf16.msra.mxu0 %v812
    %871 = vmatprep.subr.bf16.mxu0 0
    %872 = vmatpush1.bf16.msra.mxu0 %v813
    %873 = vmatprep.subr.bf16.mxu0 0
    %874 = vmatpush1.bf16.msra.mxu0 %v814
    %875 = vmatprep.subr.bf16.mxu0 0
    %876 = vmatpush1.bf16.msra.mxu0 %v815
    %877 = vmatprep.subr.bf16.mxu0 0
    %878 = vmatpush1.bf16.msra.mxu0 %v816
    %879 = vmatprep.subr.bf16.mxu0 0
    %880 = vmatpush1.bf16.msra.mxu0 %v817
    %881 = vmatprep.subr.bf16.mxu0 0
    %882 = vmatpush1.bf16.msra.mxu0 %v818
    %883 = vmatprep.mubr.bf16.mxu0 %v654
    %884 = vmatmul.mubr.bf16.gmra.mrb[0].mxu0 %v653
    %v885 = vpop.f32.mrb[0].mxu0
    %v886 = vadd.f32 0.0, %v885
    %v887 = vpop.f32.mrb[0].mxu0
    %v888 = vpop.f32.mrb[0].mxu0
    %v889 = vadd.f32 0.0, %v888
    %v890 = vpop.f32.mrb[0].mxu0
    %891 = vmatprep.mubr.bf16.mxu0 %v657
    %892 = vmatmul.mubr.bf16.gmra.mrb[0].mxu0 %v656
    %v893 = vpop.f32.mrb[0].mxu0
    %v894 = vadd.f32 0.0, %v893
    %v895 = vpop.f32.mrb[0].mxu0
    %v896 = vpop.f32.mrb[0].mxu0
    %v897 = vadd.f32 0.0, %v896
    %v898 = vpop.f32.mrb[0].mxu0
    %899 = vdwg.mxu0
    %900 = vmatprep.subr.bf16.mxu0 0
    %901 = vmatpush1.bf16.msra.mxu0 %v819
    %902 = vmatprep.subr.bf16.mxu0 0
    %903 = vmatpush1.bf16.msra.mxu0 %v820
    %904 = vmatprep.subr.bf16.mxu0 0
    %905 = vmatpush1.bf16.msra.mxu0 %v821
    %906 = vmatprep.subr.bf16.mxu0 0
    %907 = vmatpush1.bf16.msra.mxu0 %v822
    %908 = vmatprep.subr.bf16.mxu0 0
    %909 = vmatpush1.bf16.msra.mxu0 %v823
    %910 = vmatprep.subr.bf16.mxu0 0
    %911 = vmatpush1.bf16.msra.mxu0 %v824
    %912 = vmatprep.subr.bf16.mxu0 0
    %913 = vmatpush1.bf16.msra.mxu0 %v825
    %914 = vmatprep.subr.bf16.mxu0 0
    %915 = vmatpush1.bf16.msra.mxu0 %v826
    %916 = vmatprep.subr.bf16.mxu0 0
    %917 = vmatpush1.bf16.msra.mxu0 0
    %918 = vmatprep.subr.bf16.mxu0 0
    %919 = vmatpush1.bf16.msra.mxu0 0
    %920 = vmatprep.subr.bf16.mxu0 0
    %921 = vmatpush1.bf16.msra.mxu0 0
    %922 = vmatprep.subr.bf16.mxu0 0
    %923 = vmatpush1.bf16.msra.mxu0 0
    %924 = vmatprep.subr.bf16.mxu0 0
    %925 = vmatpush1.bf16.msra.mxu0 0
    %926 = vmatprep.subr.bf16.mxu0 0
    %927 = vmatpush1.bf16.msra.mxu0 0
    %928 = vmatprep.subr.bf16.mxu0 0
    %929 = vmatpush1.bf16.msra.mxu0 0
    %930 = vmatprep.subr.bf16.mxu0 0
    %931 = vmatpush1.bf16.msra.mxu0 0
    %932 = vmatprep.mubr.bf16.mxu0 0
    %933 = vmatmul.mubr.bf16.gmra.mrb[0].mxu0 %v655
    %v934 = vpop.f32.mrb[0].mxu0
    %v935 = vadd.f32 %v886, %v934
    %v936 = vpop.f32.mrb[0].mxu0
    %v937 = vpop.f32.mrb[0].mxu0
    %v938 = vadd.f32 %v889, %v937
    %v939 = vpop.f32.mrb[0].mxu0
    %940 = vmatprep.mubr.bf16.mxu0 0
    %941 = vmatmul.mubr.bf16.gmra.mrb[0].mxu0 %v658
    %v942 = vpop.f32.mrb[0].mxu0
    %v943 = vadd.f32 %v894, %v942
    %v944 = vpop.f32.mrb[0].mxu0
    %v945 = vpop.f32.mrb[0].mxu0
    %v946 = vadd.f32 %v897, %v945
    %v947 = vpop.f32.mrb[0].mxu0
    %948 = vdwg.mxu0
    %v949 = vld [vmem:[%s5] sm:$0x1]
    %v950 = vld [vmem:[%s6] sm:$0x1]
    %v951 = vadd.f32 %v935, %v938
    %v952 = vadd.f32 %v951, %v943
    %v953 = vadd.f32 %v952, %v946
    %v954 = vrot.slane %v953, 4
    %v955 = vadd.f32 %v953, %v954
    %v956 = vrot.slane %v955, 2
    %v957 = vadd.f32 %v955, %v956
    %v958 = vrot.slane %v957, 1
    %v959 = vadd.f32 %v957, %v958
    %v960 = vmul.f32 %v935, %v935
    %v961 = vmul.f32 %v938, %v938
    %v962 = vmul.f32 %v943, %v943
    %v963 = vmul.f32 %v946, %v946
    %v964 = vadd.f32 %v960, %v961
    %v965 = vadd.f32 %v964, %v962
    %v966 = vadd.f32 %v965, %v963
    %v967 = vrot.slane %v966, 4
    %v968 = vadd.f32 %v966, %v967
    %v969 = vrot.slane %v968, 2
    %v970 = vadd.f32 %v968, %v969
    %v971 = vrot.slane %v970, 1
    %v972 = vadd.f32 %v970, %v971
    %v973 = vsel %vm497, %v959, %v972
    %974 = vmatprep.subr.mxu0 0.0
    %975 = vmatpush1.msra.mxu0 %v499
    %976 = vmatprep.subr.mxu0 0.0
    %977 = vmatpush1.msra.mxu0 %v500
    %978 = vmatprep.subr.mxu0 0.0
    %979 = vmatpush1.msra.mxu0 %v501
    %980 = vmatprep.subr.mxu0 0.0
    %981 = vmatpush1.msra.mxu0 %v502
    %982 = vmatprep.subr.mxu0 0.0
    %983 = vmatpush1.msra.mxu0 %v503
    %984 = vmatprep.subr.mxu0 0.0
    %985 = vmatpush1.msra.mxu0 %v504
    %986 = vmatprep.subr.mxu0 0.0
    %987 = vmatpush1.msra.mxu0 %v505
    %988 = vmatprep.subr.mxu0 0.0
    %989 = vmatpush1.msra.mxu0 %v506
    %990 = vmatprep.subr.mxu0 0.0
    %991 = vmatpush1.msra.mxu0 %v507
    %992 = vmatprep.subr.mxu0 0.0
    %993 = vmatpush1.msra.mxu0 %v508
    %994 = vmatprep.subr.mxu0 0.0
    %995 = vmatpush1.msra.mxu0 %v509
    %996 = vmatprep.subr.mxu0 0.0
    %997 = vmatpush1.msra.mxu0 %v510
    %998 = vmatprep.subr.mxu0 0.0
    %999 = vmatpush1.msra.mxu0 %v511
    %1000 = vmatprep.subr.mxu0 0.0
    %1001 = vmatpush1.msra.mxu0 %v512
    %1002 = vmatprep.subr.mxu0 0.0
    %1003 = vmatpush1.msra.mxu0 %v513
    %1004 = vmatprep.subr.mxu0 0.0
    %1005 = vmatpush1.msra.mxu0 %v514
    %1006 = vmatprep.subr.mxu0 0.0
    %1007 = vmatpush1.msra.mxu0 0.0
    %1008 = vmatprep.subr.mxu0 0.0
    %1009 = vmatpush1.msra.mxu0 0.0
    %1010 = vmatprep.subr.mxu0 0.0
    %1011 = vmatpush1.msra.mxu0 0.0
    %1012 = vmatprep.subr.mxu0 0.0
    %1013 = vmatpush1.msra.mxu0 0.0
    %1014 = vmatprep.subr.mxu0 0.0
    %1015 = vmatpush1.msra.mxu0 0.0
    %1016 = vmatprep.subr.mxu0 0.0
    %1017 = vmatpush1.msra.mxu0 0.0
    %1018 = vmatprep.subr.mxu0 0.0
    %1019 = vmatpush1.msra.mxu0 0.0
    %1020 = vmatprep.subr.mxu0 0.0
    %1021 = vmatpush1.msra.mxu0 0.0
    %1022 = vmatprep.subr.mxu0 0.0
    %1023 = vmatpush1.msra.mxu0 0.0
    %1024 = vmatprep.subr.mxu0 0.0
    %1025 = vmatpush1.msra.mxu0 0.0
    %1026 = vmatprep.subr.mxu0 0.0
    %1027 = vmatpush1.msra.mxu0 0.0
    %1028 = vmatprep.subr.mxu0 0.0
    %1029 = vmatpush1.msra.mxu0 0.0
    %1030 = vmatprep.subr.mxu0 0.0
    %1031 = vmatpush1.msra.mxu0 0.0
    %1032 = vmatprep.subr.mxu0 0.0
    %1033 = vmatpush1.msra.mxu0 0.0
    %1034 = vmatprep.subr.mxu0 0.0
    %1035 = vmatpush1.msra.mxu0 0.0
    %1036 = vmatprep.subr.mxu0 0.0
    %1037 = vmatpush1.msra.mxu0 0.0
    %1038 = vmatprep.mubr.f32.mxu0 0.0
    %1039 = vmatmul.mubr.f32.gmra.mrb[0].mxu0 %v973
    %v1040 = vpop.f32.mrb[0].mxu0
    %v1041 = vadd.f32 0.0, %v1040
    %v1042 = vpop.f32.mrb[0].mxu0
    %1043 = vdwg.mxu0
    %v1044 = vmul.f32 %v1041, %v1041
    %v1046 = vrot.slane %v1044, 7
    %v1048 = vsub.f32 %v1041, %v1046
    %v1049 = vadd.f32 %v1048, 1e-05
    %v1050 = vrsqrt.pop %v1049
    %v1051 = vlaneseq
    %v1052 = vshrl.u32 %v1051, 7
    %v1053 = vsub.s32 0, %v1052
    %v1054 = vrot.slane %v1041, %v1053
    %v1055 = vsub.f32 %v935, %v1054
    %v1056 = vsub.f32 %v938, %v1054
    %v1057 = vsub.f32 %v943, %v1054
    %v1058 = vsub.f32 %v946, %v1054
    %v1060 = vlaneseq
    %v1061 = vshrl.u32 %v1060, 7
    %v1062 = vsub.s32 0, %v1061
    %v1063 = vrot.slane %v949, %v1062
    %v1065 = vmul.f32 %v1050, %v1063
    %v1066 = vlaneseq
    %v1067 = vshrl.u32 %v1066, 7
    %v1068 = vsub.s32 1, %v1067
    %v1069 = vrot.slane %v1065, %v1068
    %v1070 = vmul.f32 %v1055, %v1069
    %v1071 = vmul.f32 %v1056, %v1069
    %v1072 = vmul.f32 %v1057, %v1069
    %v1073 = vmul.f32 %v1058, %v1069
    %v1075 = vlaneseq
    %v1076 = vshrl.u32 %v1075, 7
    %v1077 = vsub.s32 0, %v1076
    %v1078 = vrot.slane %v950, %v1077
    %v1080 = vadd.f32 %v1070, %v1078
    %v1081 = vadd.f32 %v1071, %v1078
    %v1082 = vadd.f32 %v1072, %v1078
    %v1083 = vadd.f32 %v1073, %v1078
    %v1084 = vadd.f32 %v1080, %v147
    %v1085 = vadd.f32 %v1081, %v148
    %v1086 = vadd.f32 %v1082, %v149
    %v1087 = vadd.f32 %v1083, %v150
    %v1088 = vmax.f32 %v1084, 0.0
    %v1089 = vmax.f32 %v1085, 0.0
    %v1090 = vmax.f32 %v1086, 0.0
    %v1091 = vmax.f32 %v1087, 0.0
    %1092 = vst [vmem:[#allocation10] sm:$0xff] %v1088
    %1093 = vst [vmem:[#allocation10 + $0x8] sm:$0xff] %v1089
    %1094 = vst [vmem:[#allocation10 + $0x10] sm:$0xff] %v1090
    %1095 = vst [vmem:[#allocation10 + $0x18] sm:$0xff] %v1091
    // Predicated region
    $region50: #{tpu_custom_call.1} parent=1 // pred_check
      _
    $region51: #{tpu_custom_call.1} parent=1 // pred_check_branch
      %1097 = sbr.rel (0) target = $region53
    $region52: #{tpu_custom_call.1} parent=1 // pred_region
      %s1099 = ssub.s32 512, 512
      %1100 = vsyncadd [#allocation4], %s1099
      %s1101 = sshll.u32 [#allocation10], 4
      %s1102 = int_to_ptr.vmem [resolvable:$true] %s1101
      %1107 = dma.vmem_to_hbm [thread:$0]  %s1102, 512, %s8, [#allocation4], 128, 128, 8
    $region53: #{tpu_custom_call.1} parent=1 // pred_fallthru
      _
    // Predicated region
    $region54: #{tpu_custom_call.1} parent=1 // pred_check
      _
    $region55: #{tpu_custom_call.1} parent=1 // pred_check_branch
      %1109 = sbr.rel (0) target = $region57
    $region56: #{tpu_custom_call.1} parent=1 // pred_region
      %1110 = dma.done [#allocation4], 512
    $region57: #{tpu_custom_call.1} parent=1 // pred_fallthru
      _
    %1111 = vsyncpa [#allocation3], 1
    %1112 = vsyncpa [#allocation6], 1
    %1113 = vsyncpa [#allocation9], 1
    %1114 = vsyncpa [#allocation4], 1

</llo_original>
